<compile_context>
chip_gen: v5e
topology: v5e:2x2
jax: 0.10.0
libtpu: 0.0.40
codegen_flags: <defaults>
</compile_context>

<pallas_src>
import jax
import jax.numpy as jnp
from jax.experimental import pallas as pl
from jax.experimental.pallas import tpu as pltpu


def se_conv1x1_kernel(gate_ref, x_ref, w_ref, o_ref):
    # gate_ref: [1, C_in] f32, x_ref: [C_in, HW], w_ref: [C_out, C_in],
    # o_ref: [C_out, HW]
    g = jax.nn.sigmoid(gate_ref[...])                      # f32, EUP slot
    # Fold the gate into the (smaller) weight operand in f32, then cast once.
    w_scaled = (w_ref[...] * g).astype(jnp.bfloat16)       # [C_out, C_in] bf16
    x_bf16 = x_ref[...].astype(jnp.bfloat16)               # [C_in, HW]   bf16
    # bf16 x bf16 -> f32 accumulation on the MXU.
    o_ref[...] = jnp.dot(
        w_scaled, x_bf16, preferred_element_type=jnp.float32
    ).astype(o_ref.dtype)


def se_conv1x1(x_nchw, gate_nc11, w_oihw):
    """x_nchw: [1, C_in, H, W], gate_nc11: [1, C_in, 1, 1], w_oihw: [C_out, C_in, 1, 1]."""
    n, c_in, h, w = x_nchw.shape
    c_out = w_oihw.shape[0]
    assert n == 1, "kernel written for batch 1 (as in the reference module)"

    hw = h * w
    # Free reshapes (no data movement / no XLA transpose ops).
    x2d = x_nchw.reshape(c_in, hw)        # [C_in, HW]
    gate2d = gate_nc11.reshape(1, c_in)   # [1, C_in]
    w2d = w_oihw.reshape(c_out, c_in)     # [C_out, C_in]

    vmem = lambda: pl.BlockSpec(memory_space=pltpu.MemorySpace.VMEM)

    bytes_accessed = (
        x2d.size * x2d.dtype.itemsize
        + gate2d.size * gate2d.dtype.itemsize
        + w2d.size * w2d.dtype.itemsize
        + c_out * hw * x_nchw.dtype.itemsize
    )
    cost = pl.CostEstimate(
        flops=2 * c_out * c_in * hw,
        transcendentals=c_in,            # sigmoid over the gate channels
        bytes_accessed=bytes_accessed,
    )

    out2d = pl.pallas_call(
        se_conv1x1_kernel,
        out_shape=jax.ShapeDtypeStruct((c_out, hw), x_nchw.dtype),
        in_specs=[vmem(), vmem(), vmem()],
        out_specs=vmem(),
        cost_estimate=cost,
    )(gate2d, x2d, w2d)

    # [C_out, HW] -> NCHW [1, C_out, H, W]: free reshape, no permute.
    return out2d.reshape(1, c_out, h, w)


def reference(x_nchw, gate_nc11, w_oihw):
    g = jax.nn.sigmoid(gate_nc11)
    xg = x_nchw * g  # broadcast over H, W
    # 1x1 conv, no bias (f32 reference).
    return jax.lax.conv_general_dilated(
        xg, w_oihw, window_strides=(1, 1), padding="VALID",
        dimension_numbers=("NCHW", "OIHW", "NCHW"),
    )


if __name__ == "__main__":
    key = jax.random.PRNGKey(0)
    k1, k2, k3 = jax.random.split(key, 3)

    C_IN, C_OUT, H, W = 480, 80, 14, 14
    x155 = jax.random.normal(k1, (1, C_IN, H, W), dtype=jnp.float32)   # activations
    x159 = jax.random.normal(k2, (1, C_IN, 1, 1), dtype=jnp.float32)   # SE gate logits
    # Deterministic conv weight init (same shape as Conv2d(480, 80, 1, bias=False))
    conv_w = jax.random.normal(k3, (C_OUT, C_IN, 1, 1), dtype=jnp.float32) * 0.05

    out = se_conv1x1(x155, x159, conv_w)
    out = jax.block_until_ready(out)

    ref = jax.block_until_ready(reference(x155, x159, conv_w))
    assert out.shape == (1, C_OUT, H, W), out.shape
    # bf16 MXU operands with f32 accumulation: tolerance relaxed vs pure-f32.
    max_err = float(jnp.max(jnp.abs(out - ref)))
    assert jnp.allclose(out, ref, atol=1e-2, rtol=2e-2), max_err

    print("KERNEL_OK")
</pallas_src>

<mosaic_0001>
module attributes {stable_mosaic.version = 11 : i64} {
  func.func @se_conv1x1_kernel(%arg0: memref<1x480xf32, #tpu.memory_space<vmem>>, %arg1: memref<480x196xf32, #tpu.memory_space<vmem>>, %arg2: memref<80x480xf32, #tpu.memory_space<vmem>>, %arg3: memref<80x196xf32, #tpu.memory_space<vmem>>) attributes {dimension_semantics = [], scalar_prefetch = 0 : i64, scratch_operands = 0 : i64, tpu.core_type = #tpu.core_type<tc>} {
    %c0 = arith.constant 0 : index
    %c0_0 = arith.constant 0 : index
    %0 = vector.load %arg0[%c0, %c0_0] : memref<1x480xf32, #tpu.memory_space<vmem>>, vector<1x480xf32>
    %1 = arith.negf %0 : vector<1x480xf32>
    %2 = math.exp %1 : vector<1x480xf32>
    %cst = arith.constant 1.000000e+00 : f32
    %3 = vector.broadcast %cst : f32 to vector<1x480xf32>
    %4 = arith.addf %3, %2 : vector<1x480xf32>
    %5 = arith.divf %3, %4 : vector<1x480xf32>
    %c0_1 = arith.constant 0 : index
    %c0_2 = arith.constant 0 : index
    %6 = vector.load %arg2[%c0_1, %c0_2] : memref<80x480xf32, #tpu.memory_space<vmem>>, vector<80x480xf32>
    %7 = vector.broadcast %5 : vector<1x480xf32> to vector<80x480xf32>
    %8 = arith.mulf %6, %7 : vector<80x480xf32>
    %9 = arith.truncf %8 : vector<80x480xf32> to vector<80x480xbf16>
    %c0_3 = arith.constant 0 : index
    %c0_4 = arith.constant 0 : index
    %10 = vector.load %arg1[%c0_3, %c0_4] : memref<480x196xf32, #tpu.memory_space<vmem>>, vector<480x196xf32>
    %11 = arith.truncf %10 : vector<480x196xf32> to vector<480x196xbf16>
    %cst_5 = arith.constant dense<0.000000e+00> : vector<80x196xf32>
    %12 = tpu.matmul %9, %11, %cst_5 {dimension_numbers = #tpu.dot_dimension_numbers<[1], [0], [0], [1], [0, 0, 1, 1], [], []>} : vector<80x480xbf16>, vector<480x196xbf16>, vector<80x196xf32> -> vector<80x196xf32>
    %c0_6 = arith.constant 0 : index
    %c0_7 = arith.constant 0 : index
    %13 = vector.load %arg3[%c0_6, %c0_7] : memref<80x196xf32, #tpu.memory_space<vmem>>, vector<80x196xf32>
    tpu.vector_store %arg3[%c0_6, %c0_7], %12 {strides = array<i32>} : memref<80x196xf32, #tpu.memory_space<vmem>>, vector<80x196xf32>,
    return
  }
}

</mosaic_0001>

<llo_original>
// kernel: tpu_custom_call.1
$region0: #{tpu_custom_call.1}
  #allocation0 [shape = 'u32[]', space=smem, size = 0x4, offset = 0x4, fixed_abs, tag = 'smem constant byte address 0x4 - core index']
  #allocation1 [shape = 'u32[72,128]{1,0:T(1,128)}', space=vmem, size = 0x9000, scoped, tag = 'internal scratch']
  %s0 = inlined_call_operand.vmem [shape: f32[1,480], index: 0, kind: input, shape index: {}]
  %s1 = inlined_call_operand.vmem [shape: f32[480,196], index: 1, kind: input, shape index: {}]
  %s2 = inlined_call_operand.vmem [shape: f32[80,480], index: 2, kind: input, shape index: {}]
  %s3 = inlined_call_operand.hbm [shape: f32[80,196], index: 3, kind: output, shape index: {}]
  %s4 = sld [smem:[#allocation0]]
  $region22: #{tpu_custom_call.1} parent=0
    _
  %s6 = ssub.s32 1, %s4
  %s7 = scalar_select 0, %s6, %s4
  $region1: #{tpu_custom_call.1} parent=0
    #allocation2 [shape = 'u8[81920]{0}', space=vmem, size = 0x14000, scoped, tag = 'output window, operand 0, single buffered']
    #allocation3 [shape = 's32[1]{0}', space=sflag, size = 0x4, scoped, tag = 'scoped memory for tpu_custom_call.1']
    %8 = vsyncpa [#allocation3], 0
    // Predicated region
    $region2: #{tpu_custom_call.1} parent=1 // pred_check
      _
    $region3: #{tpu_custom_call.1} parent=1 // pred_check_branch
      %10 = sbr.rel (0) target = $region5
    $region4: #{tpu_custom_call.1} parent=1 // pred_region
      _
    $region5: #{tpu_custom_call.1} parent=1 // pred_fallthru
      _
    // Predicated region
    $region6: #{tpu_custom_call.1} parent=1 // pred_check
      _
    $region7: #{tpu_custom_call.1} parent=1 // pred_check_branch
      %12 = sbr.rel (0) target = $region9
    $region8: #{tpu_custom_call.1} parent=1 // pred_region
      _
    $region9: #{tpu_custom_call.1} parent=1 // pred_fallthru
      _
    // Predicated region
    $region10: #{tpu_custom_call.1} parent=1 // pred_check
      _
    $region11: #{tpu_custom_call.1} parent=1 // pred_check_branch
      %14 = sbr.rel (0) target = $region13
    $region12: #{tpu_custom_call.1} parent=1 // pred_region
      _
    $region13: #{tpu_custom_call.1} parent=1 // pred_fallthru
      _
    %v16 = vld [vmem:[%s0] sm:$0xf]
    %v17 = vxor.u32 %v16, 2147483648
    %v18 = vmul.f32 %v17, 1.442695
    %v19 = vpow.pop %v18
    %v20 = vadd.f32 %v19, 1.0
    %v21 = vrcp.pop %v20
    %v22 = vmul.f32 %v20, %v21
    %v23 = vsub.f32 1.0, %v22
    %v24 = vmul.f32 %v21, %v23
    %v25 = vadd.f32 %v21, %v24
    %vm26 = vweird.f32 %v20
    %vm27 = vweird.f32 %v21
    %vm28 = vmor %vm26, %vm27
    %v29 = vsel %vm28, %v21, %v25
    %v30 = vand.u32 2147483647, %v20
    %vm31 = vcmp.eq.f32.partialorder %v30, 8.507059e+37
    %v32 = vand.u32 %v20, 2147483648
    %v33 = vor.u32 1.1754944e-38, %v32
    %v34 = vsel %vm31, %v33, %v29
    %v35 = vmul.f32 1.0, %v34
    %v36 = vld [vmem:[%s2] sm:$0xff]
    %v37 = vld [vmem:[%s2 + $0x8] sm:$0xff]
    %v38 = vld [vmem:[%s2 + $0x10] sm:$0xff]
    %v39 = vld [vmem:[%s2 + $0x18] sm:$0xff]
    %v40 = vld [vmem:[%s2 + $0x20] sm:$0xff]
    %v41 = vld [vmem:[%s2 + $0x28] sm:$0xff]
    %v42 = vld [vmem:[%s2 + $0x30] sm:$0xff]
    %v43 = vld [vmem:[%s2 + $0x38] sm:$0xff]
    %v44 = vld [vmem:[%s2 + $0x40] sm:$0xff]
    %v45 = vld [vmem:[%s2 + $0x48] sm:$0xff]
    %v46 = vld [vmem:[%s2 + $0x50] sm:$0xff]
    %v47 = vld [vmem:[%s2 + $0x58] sm:$0xff]
    %v48 = vld [vmem:[%s2 + $0x60] sm:$0xff]
    %v49 = vld [vmem:[%s2 + $0x68] sm:$0xff]
    %v50 = vld [vmem:[%s2 + $0x70] sm:$0xff]
    %v51 = vld [vmem:[%s2 + $0x78] sm:$0xff]
    %v52 = vld [vmem:[%s2 + $0x80] sm:$0xff]
    %v53 = vld [vmem:[%s2 + $0x88] sm:$0xff]
    %v54 = vld [vmem:[%s2 + $0x90] sm:$0xff]
    %v55 = vld [vmem:[%s2 + $0x98] sm:$0xff]
    %v56 = vld [vmem:[%s2 + $0xa0] sm:$0xff]
    %v57 = vld [vmem:[%s2 + $0xa8] sm:$0xff]
    %v58 = vld [vmem:[%s2 + $0xb0] sm:$0xff]
    %v59 = vld [vmem:[%s2 + $0xb8] sm:$0xff]
    %v60 = vld [vmem:[%s2 + $0xc0] sm:$0xff]
    %v61 = vld [vmem:[%s2 + $0xc8] sm:$0xff]
    %v62 = vld [vmem:[%s2 + $0xd0] sm:$0xff]
    %v63 = vld [vmem:[%s2 + $0xd8] sm:$0xff]
    %v64 = vld [vmem:[%s2 + $0xe0] sm:$0xff]
    %v65 = vld [vmem:[%s2 + $0xe8] sm:$0xff]
    %v66 = vld [vmem:[%s2 + $0xf0] sm:$0xff]
    %v67 = vld [vmem:[%s2 + $0xf8] sm:$0xff]
    %v68 = vld [vmem:[%s2 + $0x100] sm:$0xff]
    %v69 = vld [vmem:[%s2 + $0x108] sm:$0xff]
    %v70 = vld [vmem:[%s2 + $0x110] sm:$0xff]
    %v71 = vld [vmem:[%s2 + $0x118] sm:$0xff]
    %v72 = vld [vmem:[%s2 + $0x120] sm:$0xff]
    %v73 = vld [vmem:[%s2 + $0x128] sm:$0xff]
    %v74 = vld [vmem:[%s2 + $0x130] sm:$0xff]
    %v75 = vld [vmem:[%s2 + $0x138] sm:$0xff]
    %v77 = vperm.slane %v35, 0
    %v78 = vperm.slane %v35, 1
    %v79 = vperm.slane %v35, 2
    %v80 = vperm.slane %v35, 3
    %v85 = vmul.f32 %v36, %v77
    %v86 = vmul.f32 %v37, %v78
    %v87 = vmul.f32 %v38, %v79
    %v88 = vmul.f32 %v39, %v80
    %v89 = vmul.f32 %v40, %v77
    %v90 = vmul.f32 %v41, %v78
    %v91 = vmul.f32 %v42, %v79
    %v92 = vmul.f32 %v43, %v80
    %v93 = vmul.f32 %v44, %v77
    %v94 = vmul.f32 %v45, %v78
    %v95 = vmul.f32 %v46, %v79
    %v96 = vmul.f32 %v47, %v80
    %v97 = vmul.f32 %v48, %v77
    %v98 = vmul.f32 %v49, %v78
    %v99 = vmul.f32 %v50, %v79
    %v100 = vmul.f32 %v51, %v80
    %v101 = vmul.f32 %v52, %v77
    %v102 = vmul.f32 %v53, %v78
    %v103 = vmul.f32 %v54, %v79
    %v104 = vmul.f32 %v55, %v80
    %v105 = vmul.f32 %v56, %v77
    %v106 = vmul.f32 %v57, %v78
    %v107 = vmul.f32 %v58, %v79
    %v108 = vmul.f32 %v59, %v80
    %v109 = vmul.f32 %v60, %v77
    %v110 = vmul.f32 %v61, %v78
    %v111 = vmul.f32 %v62, %v79
    %v112 = vmul.f32 %v63, %v80
    %v113 = vmul.f32 %v64, %v77
    %v114 = vmul.f32 %v65, %v78
    %v115 = vmul.f32 %v66, %v79
    %v116 = vmul.f32 %v67, %v80
    %v117 = vmul.f32 %v68, %v77
    %v118 = vmul.f32 %v69, %v78
    %v119 = vmul.f32 %v70, %v79
    %v120 = vmul.f32 %v71, %v80
    %v121 = vmul.f32 %v72, %v77
    %v122 = vmul.f32 %v73, %v78
    %v123 = vmul.f32 %v74, %v79
    %v124 = vmul.f32 %v75, %v80
    %v125 = vpack.c.bf16 %v89, %v85
    %v126 = vpack.c.bf16 %v90, %v86
    %v127 = vpack.c.bf16 %v91, %v87
    %v128 = vpack.c.bf16 %v92, %v88
    %v129 = vpack.c.bf16 %v97, %v93
    %v130 = vpack.c.bf16 %v98, %v94
    %v131 = vpack.c.bf16 %v99, %v95
    %v132 = vpack.c.bf16 %v100, %v96
    %v133 = vpack.c.bf16 %v105, %v101
    %v134 = vpack.c.bf16 %v106, %v102
    %v135 = vpack.c.bf16 %v107, %v103
    %v136 = vpack.c.bf16 %v108, %v104
    %v137 = vpack.c.bf16 %v113, %v109
    %v138 = vpack.c.bf16 %v114, %v110
    %v139 = vpack.c.bf16 %v115, %v111
    %v140 = vpack.c.bf16 %v116, %v112
    %v141 = vpack.c.bf16 %v121, %v117
    %v142 = vpack.c.bf16 %v122, %v118
    %v143 = vpack.c.bf16 %v123, %v119
    %v144 = vpack.c.bf16 %v124, %v120
    %v145 = vld [vmem:[%s1] sm:$0xff]
    %v146 = vld [vmem:[%s1 + $0x8] sm:$0xff]
    %v147 = vld [vmem:[%s1 + $0x10] sm:$0xff]
    %v148 = vld [vmem:[%s1 + $0x18] sm:$0xff]
    %v149 = vld [vmem:[%s1 + $0x20] sm:$0xff]
    %v150 = vld [vmem:[%s1 + $0x28] sm:$0xff]
    %v151 = vld [vmem:[%s1 + $0x30] sm:$0xff]
    %v152 = vld [vmem:[%s1 + $0x38] sm:$0xff]
    %v153 = vld [vmem:[%s1 + $0x40] sm:$0xff]
    %v154 = vld [vmem:[%s1 + $0x48] sm:$0xff]
    %v155 = vld [vmem:[%s1 + $0x50] sm:$0xff]
    %v156 = vld [vmem:[%s1 + $0x58] sm:$0xff]
    %v157 = vld [vmem:[%s1 + $0x60] sm:$0xff]
    %v158 = vld [vmem:[%s1 + $0x68] sm:$0xff]
    %v159 = vld [vmem:[%s1 + $0x70] sm:$0xff]
    %v160 = vld [vmem:[%s1 + $0x78] sm:$0xff]
    %v161 = vld [vmem:[%s1 + $0x80] sm:$0xff]
    %v162 = vld [vmem:[%s1 + $0x88] sm:$0xff]
    %v163 = vld [vmem:[%s1 + $0x90] sm:$0xff]
    %v164 = vld [vmem:[%s1 + $0x98] sm:$0xff]
    %v165 = vld [vmem:[%s1 + $0xa0] sm:$0xff]
    %v166 = vld [vmem:[%s1 + $0xa8] sm:$0xff]
    %v167 = vld [vmem:[%s1 + $0xb0] sm:$0xff]
    %v168 = vld [vmem:[%s1 + $0xb8] sm:$0xff]
    %v169 = vld [vmem:[%s1 + $0xc0] sm:$0xff]
    %v170 = vld [vmem:[%s1 + $0xc8] sm:$0xff]
    %v171 = vld [vmem:[%s1 + $0xd0] sm:$0xff]
    %v172 = vld [vmem:[%s1 + $0xd8] sm:$0xff]
    %v173 = vld [vmem:[%s1 + $0xe0] sm:$0xff]
    %v174 = vld [vmem:[%s1 + $0xe8] sm:$0xff]
    %v175 = vld [vmem:[%s1 + $0xf0] sm:$0xff]
    %v176 = vld [vmem:[%s1 + $0xf8] sm:$0xff]
    %v177 = vld [vmem:[%s1 + $0x100] sm:$0xff]
    %v178 = vld [vmem:[%s1 + $0x108] sm:$0xff]
    %v179 = vld [vmem:[%s1 + $0x110] sm:$0xff]
    %v180 = vld [vmem:[%s1 + $0x118] sm:$0xff]
    %v181 = vld [vmem:[%s1 + $0x120] sm:$0xff]
    %v182 = vld [vmem:[%s1 + $0x128] sm:$0xff]
    %v183 = vld [vmem:[%s1 + $0x130] sm:$0xff]
    %v184 = vld [vmem:[%s1 + $0x138] sm:$0xff]
    %v185 = vld [vmem:[%s1 + $0x140] sm:$0xff]
    %v186 = vld [vmem:[%s1 + $0x148] sm:$0xff]
    %v187 = vld [vmem:[%s1 + $0x150] sm:$0xff]
    %v188 = vld [vmem:[%s1 + $0x158] sm:$0xff]
    %v189 = vld [vmem:[%s1 + $0x160] sm:$0xff]
    %v190 = vld [vmem:[%s1 + $0x168] sm:$0xff]
    %v191 = vld [vmem:[%s1 + $0x170] sm:$0xff]
    %v192 = vld [vmem:[%s1 + $0x178] sm:$0xff]
    %v193 = vld [vmem:[%s1 + $0x180] sm:$0xff]
    %v194 = vld [vmem:[%s1 + $0x188] sm:$0xff]
    %v195 = vld [vmem:[%s1 + $0x190] sm:$0xff]
    %v196 = vld [vmem:[%s1 + $0x198] sm:$0xff]
    %v197 = vld [vmem:[%s1 + $0x1a0] sm:$0xff]
    %v198 = vld [vmem:[%s1 + $0x1a8] sm:$0xff]
    %v199 = vld [vmem:[%s1 + $0x1b0] sm:$0xff]
    %v200 = vld [vmem:[%s1 + $0x1b8] sm:$0xff]
    %v201 = vld [vmem:[%s1 + $0x1c0] sm:$0xff]
    %v202 = vld [vmem:[%s1 + $0x1c8] sm:$0xff]
    %v203 = vld [vmem:[%s1 + $0x1d0] sm:$0xff]
    %v204 = vld [vmem:[%s1 + $0x1d8] sm:$0xff]
    %v205 = vld [vmem:[%s1 + $0x1e0] sm:$0xff]
    %v206 = vld [vmem:[%s1 + $0x1e8] sm:$0xff]
    %v207 = vld [vmem:[%s1 + $0x1f0] sm:$0xff]
    %v208 = vld [vmem:[%s1 + $0x1f8] sm:$0xff]
    %v209 = vld [vmem:[%s1 + $0x200] sm:$0xff]
    %v210 = vld [vmem:[%s1 + $0x208] sm:$0xff]
    %v211 = vld [vmem:[%s1 + $0x210] sm:$0xff]
    %v212 = vld [vmem:[%s1 + $0x218] sm:$0xff]
    %v213 = vld [vmem:[%s1 + $0x220] sm:$0xff]
    %v214 = vld [vmem:[%s1 + $0x228] sm:$0xff]
    %v215 = vld [vmem:[%s1 + $0x230] sm:$0xff]
    %v216 = vld [vmem:[%s1 + $0x238] sm:$0xff]
    %v217 = vld [vmem:[%s1 + $0x240] sm:$0xff]
    %v218 = vld [vmem:[%s1 + $0x248] sm:$0xff]
    %v219 = vld [vmem:[%s1 + $0x250] sm:$0xff]
    %v220 = vld [vmem:[%s1 + $0x258] sm:$0xff]
    %v221 = vld [vmem:[%s1 + $0x260] sm:$0xff]
    %v222 = vld [vmem:[%s1 + $0x268] sm:$0xff]
    %v223 = vld [vmem:[%s1 + $0x270] sm:$0xff]
    %v224 = vld [vmem:[%s1 + $0x278] sm:$0xff]
    %v225 = vld [vmem:[%s1 + $0x280] sm:$0xff]
    %v226 = vld [vmem:[%s1 + $0x288] sm:$0xff]
    %v227 = vld [vmem:[%s1 + $0x290] sm:$0xff]
    %v228 = vld [vmem:[%s1 + $0x298] sm:$0xff]
    %v229 = vld [vmem:[%s1 + $0x2a0] sm:$0xff]
    %v230 = vld [vmem:[%s1 + $0x2a8] sm:$0xff]
    %v231 = vld [vmem:[%s1 + $0x2b0] sm:$0xff]
    %v232 = vld [vmem:[%s1 + $0x2b8] sm:$0xff]
    %v233 = vld [vmem:[%s1 + $0x2c0] sm:$0xff]
    %v234 = vld [vmem:[%s1 + $0x2c8] sm:$0xff]
    %v235 = vld [vmem:[%s1 + $0x2d0] sm:$0xff]
    %v236 = vld [vmem:[%s1 + $0x2d8] sm:$0xff]
    %v237 = vld [vmem:[%s1 + $0x2e0] sm:$0xff]
    %v238 = vld [vmem:[%s1 + $0x2e8] sm:$0xff]
    %v239 = vld [vmem:[%s1 + $0x2f0] sm:$0xff]
    %v240 = vld [vmem:[%s1 + $0x2f8] sm:$0xff]
    %v241 = vld [vmem:[%s1 + $0x300] sm:$0xff]
    %v242 = vld [vmem:[%s1 + $0x308] sm:$0xff]
    %v243 = vld [vmem:[%s1 + $0x310] sm:$0xff]
    %v244 = vld [vmem:[%s1 + $0x318] sm:$0xff]
    %v245 = vld [vmem:[%s1 + $0x320] sm:$0xff]
    %v246 = vld [vmem:[%s1 + $0x328] sm:$0xff]
    %v247 = vld [vmem:[%s1 + $0x330] sm:$0xff]
    %v248 = vld [vmem:[%s1 + $0x338] sm:$0xff]
    %v249 = vld [vmem:[%s1 + $0x340] sm:$0xff]
    %v250 = vld [vmem:[%s1 + $0x348] sm:$0xff]
    %v251 = vld [vmem:[%s1 + $0x350] sm:$0xff]
    %v252 = vld [vmem:[%s1 + $0x358] sm:$0xff]
    %v253 = vld [vmem:[%s1 + $0x360] sm:$0xff]
    %v254 = vld [vmem:[%s1 + $0x368] sm:$0xff]
    %v255 = vld [vmem:[%s1 + $0x370] sm:$0xff]
    %v256 = vld [vmem:[%s1 + $0x378] sm:$0xff]
    %v257 = vld [vmem:[%s1 + $0x380] sm:$0xff]
    %v258 = vld [vmem:[%s1 + $0x388] sm:$0xff]
    %v259 = vld [vmem:[%s1 + $0x390] sm:$0xff]
    %v260 = vld [vmem:[%s1 + $0x398] sm:$0xff]
    %v261 = vld [vmem:[%s1 + $0x3a0] sm:$0xff]
    %v262 = vld [vmem:[%s1 + $0x3a8] sm:$0xff]
    %v263 = vld [vmem:[%s1 + $0x3b0] sm:$0xff]
    %v264 = vld [vmem:[%s1 + $0x3b8] sm:$0xff]
    %v265 = vpack.c.bf16 %v147, %v145
    %v266 = vpack.c.bf16 %v148, %v146
    %v267 = vpack.c.bf16 %v151, %v149
    %v268 = vpack.c.bf16 %v152, %v150
    %v269 = vpack.c.bf16 %v155, %v153
    %v270 = vpack.c.bf16 %v156, %v154
    %v271 = vpack.c.bf16 %v159, %v157
    %v272 = vpack.c.bf16 %v160, %v158
    %v273 = vpack.c.bf16 %v163, %v161
    %v274 = vpack.c.bf16 %v164, %v162
    %v275 = vpack.c.bf16 %v167, %v165
    %v276 = vpack.c.bf16 %v168, %v166
    %v277 = vpack.c.bf16 %v171, %v169
    %v278 = vpack.c.bf16 %v172, %v170
    %v279 = vpack.c.bf16 %v175, %v173
    %v280 = vpack.c.bf16 %v176, %v174
    %v281 = vpack.c.bf16 %v179, %v177
    %v282 = vpack.c.bf16 %v180, %v178
    %v283 = vpack.c.bf16 %v183, %v181
    %v284 = vpack.c.bf16 %v184, %v182
    %v285 = vpack.c.bf16 %v187, %v185
    %v286 = vpack.c.bf16 %v188, %v186
    %v287 = vpack.c.bf16 %v191, %v189
    %v288 = vpack.c.bf16 %v192, %v190
    %v289 = vpack.c.bf16 %v195, %v193
    %v290 = vpack.c.bf16 %v196, %v194
    %v291 = vpack.c.bf16 %v199, %v197
    %v292 = vpack.c.bf16 %v200, %v198
    %v293 = vpack.c.bf16 %v203, %v201
    %v294 = vpack.c.bf16 %v204, %v202
    %v295 = vpack.c.bf16 %v207, %v205
    %v296 = vpack.c.bf16 %v208, %v206
    %v297 = vpack.c.bf16 %v211, %v209
    %v298 = vpack.c.bf16 %v212, %v210
    %v299 = vpack.c.bf16 %v215, %v213
    %v300 = vpack.c.bf16 %v216, %v214
    %v301 = vpack.c.bf16 %v219, %v217
    %v302 = vpack.c.bf16 %v220, %v218
    %v303 = vpack.c.bf16 %v223, %v221
    %v304 = vpack.c.bf16 %v224, %v222
    %v305 = vpack.c.bf16 %v227, %v225
    %v306 = vpack.c.bf16 %v228, %v226
    %v307 = vpack.c.bf16 %v231, %v229
    %v308 = vpack.c.bf16 %v232, %v230
    %v309 = vpack.c.bf16 %v235, %v233
    %v310 = vpack.c.bf16 %v236, %v234
    %v311 = vpack.c.bf16 %v239, %v237
    %v312 = vpack.c.bf16 %v240, %v238
    %v313 = vpack.c.bf16 %v243, %v241
    %v314 = vpack.c.bf16 %v244, %v242
    %v315 = vpack.c.bf16 %v247, %v245
    %v316 = vpack.c.bf16 %v248, %v246
    %v317 = vpack.c.bf16 %v251, %v249
    %v318 = vpack.c.bf16 %v252, %v250
    %v319 = vpack.c.bf16 %v255, %v253
    %v320 = vpack.c.bf16 %v256, %v254
    %v321 = vpack.c.bf16 %v259, %v257
    %v322 = vpack.c.bf16 %v260, %v258
    %v323 = vpack.c.bf16 %v263, %v261
    %v324 = vpack.c.bf16 %v264, %v262
    %vm325 = vcmask 785408
    %v327 = vsel %vm325, %v128, 0
    %v330 = vsel %vm325, %v132, 0
    %v333 = vsel %vm325, %v136, 0
    %v336 = vsel %vm325, %v140, 0
    %v339 = vsel %vm325, %v144, 0
    %341 = vmatpush.bf16.msra.mxu0 %v279
    %342 = vmatpush.bf16.msra.mxu0 %v277
    %343 = vmatpush.bf16.msra.mxu0 %v275
    %344 = vmatpush.bf16.msra.mxu0 %v273
    %345 = vmatpush.bf16.msra.mxu0 %v271
    %346 = vmatpush.bf16.msra.mxu0 %v269
    %347 = vmatpush.bf16.msra.mxu0 %v267
    %348 = vmatpush.bf16.msra.mxu0 %v265
    %349 = vmatmul.bf16.gmra.mxu0 %v125
    %v350 = vpop.f32.mrf.mxu0
    %v351 = vadd.f32 0.0, %v350
    %v352 = vpop.f32.mrf.mxu0
    %v353 = vadd.f32 0.0, %v352
    %354 = vmatmul.bf16.gmra.mxu0 %v129
    %v355 = vpop.f32.mrf.mxu0
    %v356 = vadd.f32 0.0, %v355
    %v357 = vpop.f32.mrf.mxu0
    %v358 = vadd.f32 0.0, %v357
    %359 = vmatmul.bf16.gmra.mxu0 %v133
    %v360 = vpop.f32.mrf.mxu0
    %v361 = vadd.f32 0.0, %v360
    %v362 = vpop.f32.mrf.mxu0
    %v363 = vadd.f32 0.0, %v362
    %364 = vmatmul.bf16.gmra.mxu0 %v137
    %v365 = vpop.f32.mrf.mxu0
    %v366 = vadd.f32 0.0, %v365
    %v367 = vpop.f32.mrf.mxu0
    %v368 = vadd.f32 0.0, %v367
    %369 = vmatmul.bf16.gmra.mxu0 %v141
    %v370 = vpop.f32.mrf.mxu0
    %v371 = vadd.f32 0.0, %v370
    %v372 = vpop.f32.mrf.mxu0
    %v373 = vadd.f32 0.0, %v372
    %374 = vdwg.mxu0
    %375 = vmatpush.bf16.msra.mxu0 %v295
    %376 = vmatpush.bf16.msra.mxu0 %v293
    %377 = vmatpush.bf16.msra.mxu0 %v291
    %378 = vmatpush.bf16.msra.mxu0 %v289
    %379 = vmatpush.bf16.msra.mxu0 %v287
    %380 = vmatpush.bf16.msra.mxu0 %v285
    %381 = vmatpush.bf16.msra.mxu0 %v283
    %382 = vmatpush.bf16.msra.mxu0 %v281
    %383 = vmatmul.bf16.gmra.mxu0 %v126
    %v384 = vpop.f32.mrf.mxu0
    %v385 = vadd.f32 %v351, %v384
    %v386 = vpop.f32.mrf.mxu0
    %v387 = vadd.f32 %v353, %v386
    %388 = vmatmul.bf16.gmra.mxu0 %v130
    %v389 = vpop.f32.mrf.mxu0
    %v390 = vadd.f32 %v356, %v389
    %v391 = vpop.f32.mrf.mxu0
    %v392 = vadd.f32 %v358, %v391
    %393 = vmatmul.bf16.gmra.mxu0 %v134
    %v394 = vpop.f32.mrf.mxu0
    %v395 = vadd.f32 %v361, %v394
    %v396 = vpop.f32.mrf.mxu0
    %v397 = vadd.f32 %v363, %v396
    %398 = vmatmul.bf16.gmra.mxu0 %v138
    %v399 = vpop.f32.mrf.mxu0
    %v400 = vadd.f32 %v366, %v399
    %v401 = vpop.f32.mrf.mxu0
    %v402 = vadd.f32 %v368, %v401
    %403 = vmatmul.bf16.gmra.mxu0 %v142
    %v404 = vpop.f32.mrf.mxu0
    %v405 = vadd.f32 %v371, %v404
    %v406 = vpop.f32.mrf.mxu0
    %v407 = vadd.f32 %v373, %v406
    %408 = vdwg.mxu0
    %409 = vmatpush.bf16.msra.mxu0 %v311
    %410 = vmatpush.bf16.msra.mxu0 %v309
    %411 = vmatpush.bf16.msra.mxu0 %v307
    %412 = vmatpush.bf16.msra.mxu0 %v305
    %413 = vmatpush.bf16.msra.mxu0 %v303
    %414 = vmatpush.bf16.msra.mxu0 %v301
    %415 = vmatpush.bf16.msra.mxu0 %v299
    %416 = vmatpush.bf16.msra.mxu0 %v297
    %417 = vmatmul.bf16.gmra.mxu0 %v127
    %v418 = vpop.f32.mrf.mxu0
    %v419 = vadd.f32 %v385, %v418
    %v420 = vpop.f32.mrf.mxu0
    %v421 = vadd.f32 %v387, %v420
    %422 = vmatmul.bf16.gmra.mxu0 %v131
    %v423 = vpop.f32.mrf.mxu0
    %v424 = vadd.f32 %v390, %v423
    %v425 = vpop.f32.mrf.mxu0
    %v426 = vadd.f32 %v392, %v425
    %427 = vmatmul.bf16.gmra.mxu0 %v135
    %v428 = vpop.f32.mrf.mxu0
    %v429 = vadd.f32 %v395, %v428
    %v430 = vpop.f32.mrf.mxu0
    %v431 = vadd.f32 %v397, %v430
    %432 = vmatmul.bf16.gmra.mxu0 %v139
    %v433 = vpop.f32.mrf.mxu0
    %v434 = vadd.f32 %v400, %v433
    %v435 = vpop.f32.mrf.mxu0
    %v436 = vadd.f32 %v402, %v435
    %437 = vmatmul.bf16.gmra.mxu0 %v143
    %v438 = vpop.f32.mrf.mxu0
    %v439 = vadd.f32 %v405, %v438
    %v440 = vpop.f32.mrf.mxu0
    %v441 = vadd.f32 %v407, %v440
    %442 = vdwg.mxu0
    %443 = vmatpush.bf16.msra.mxu0 0
    %444 = vmatpush.bf16.msra.mxu0 0
    %445 = vmatpush.bf16.msra.mxu0 %v323
    %446 = vmatpush.bf16.msra.mxu0 %v321
    %447 = vmatpush.bf16.msra.mxu0 %v319
    %448 = vmatpush.bf16.msra.mxu0 %v317
    %449 = vmatpush.bf16.msra.mxu0 %v315
    %450 = vmatpush.bf16.msra.mxu0 %v313
    %451 = vmatmul.bf16.gmra.mxu0 %v327
    %v452 = vpop.f32.mrf.mxu0
    %v453 = vadd.f32 %v419, %v452
    %v454 = vpop.f32.mrf.mxu0
    %v455 = vadd.f32 %v421, %v454
    %456 = vmatmul.bf16.gmra.mxu0 %v330
    %v457 = vpop.f32.mrf.mxu0
    %v458 = vadd.f32 %v424, %v457
    %v459 = vpop.f32.mrf.mxu0
    %v460 = vadd.f32 %v426, %v459
    %461 = vmatmul.bf16.gmra.mxu0 %v333
    %v462 = vpop.f32.mrf.mxu0
    %v463 = vadd.f32 %v429, %v462
    %v464 = vpop.f32.mrf.mxu0
    %v465 = vadd.f32 %v431, %v464
    %466 = vmatmul.bf16.gmra.mxu0 %v336
    %v467 = vpop.f32.mrf.mxu0
    %v468 = vadd.f32 %v434, %v467
    %v469 = vpop.f32.mrf.mxu0
    %v470 = vadd.f32 %v436, %v469
    %471 = vmatmul.bf16.gmra.mxu0 %v339
    %v472 = vpop.f32.mrf.mxu0
    %v473 = vadd.f32 %v439, %v472
    %v474 = vpop.f32.mrf.mxu0
    %v475 = vadd.f32 %v441, %v474
    %476 = vdwg.mxu0
    %477 = vmatpush.bf16.msra.mxu0 %v280
    %478 = vmatpush.bf16.msra.mxu0 %v278
    %479 = vmatpush.bf16.msra.mxu0 %v276
    %480 = vmatpush.bf16.msra.mxu0 %v274
    %481 = vmatpush.bf16.msra.mxu0 %v272
    %482 = vmatpush.bf16.msra.mxu0 %v270
    %483 = vmatpush.bf16.msra.mxu0 %v268
    %484 = vmatpush.bf16.msra.mxu0 %v266
    %485 = vmatmul.bf16.gmra.mxu0 %v125
    %v486 = vpop.f32.mrf.mxu0
    %v487 = vadd.f32 0.0, %v486
    %v488 = vpop.f32.mrf.mxu0
    %v489 = vadd.f32 0.0, %v488
    %490 = vmatmul.bf16.gmra.mxu0 %v129
    %v491 = vpop.f32.mrf.mxu0
    %v492 = vadd.f32 0.0, %v491
    %v493 = vpop.f32.mrf.mxu0
    %v494 = vadd.f32 0.0, %v493
    %495 = vmatmul.bf16.gmra.mxu0 %v133
    %v496 = vpop.f32.mrf.mxu0
    %v497 = vadd.f32 0.0, %v496
    %v498 = vpop.f32.mrf.mxu0
    %v499 = vadd.f32 0.0, %v498
    %500 = vmatmul.bf16.gmra.mxu0 %v137
    %v501 = vpop.f32.mrf.mxu0
    %v502 = vadd.f32 0.0, %v501
    %v503 = vpop.f32.mrf.mxu0
    %v504 = vadd.f32 0.0, %v503
    %505 = vmatmul.bf16.gmra.mxu0 %v141
    %v506 = vpop.f32.mrf.mxu0
    %v507 = vadd.f32 0.0, %v506
    %v508 = vpop.f32.mrf.mxu0
    %v509 = vadd.f32 0.0, %v508
    %510 = vdwg.mxu0
    %511 = vmatpush.bf16.msra.mxu0 %v296
    %512 = vmatpush.bf16.msra.mxu0 %v294
    %513 = vmatpush.bf16.msra.mxu0 %v292
    %514 = vmatpush.bf16.msra.mxu0 %v290
    %515 = vmatpush.bf16.msra.mxu0 %v288
    %516 = vmatpush.bf16.msra.mxu0 %v286
    %517 = vmatpush.bf16.msra.mxu0 %v284
    %518 = vmatpush.bf16.msra.mxu0 %v282
    %519 = vmatmul.bf16.gmra.mxu0 %v126
    %v520 = vpop.f32.mrf.mxu0
    %v521 = vadd.f32 %v487, %v520
    %v522 = vpop.f32.mrf.mxu0
    %v523 = vadd.f32 %v489, %v522
    %524 = vmatmul.bf16.gmra.mxu0 %v130
    %v525 = vpop.f32.mrf.mxu0
    %v526 = vadd.f32 %v492, %v525
    %v527 = vpop.f32.mrf.mxu0
    %v528 = vadd.f32 %v494, %v527
    %529 = vmatmul.bf16.gmra.mxu0 %v134
    %v530 = vpop.f32.mrf.mxu0
    %v531 = vadd.f32 %v497, %v530
    %v532 = vpop.f32.mrf.mxu0
    %v533 = vadd.f32 %v499, %v532
    %534 = vmatmul.bf16.gmra.mxu0 %v138
    %v535 = vpop.f32.mrf.mxu0
    %v536 = vadd.f32 %v502, %v535
    %v537 = vpop.f32.mrf.mxu0
    %v538 = vadd.f32 %v504, %v537
    %539 = vmatmul.bf16.gmra.mxu0 %v142
    %v540 = vpop.f32.mrf.mxu0
    %v541 = vadd.f32 %v507, %v540
    %v542 = vpop.f32.mrf.mxu0
    %v543 = vadd.f32 %v509, %v542
    %544 = vdwg.mxu0
    %545 = vmatpush.bf16.msra.mxu0 %v312
    %546 = vmatpush.bf16.msra.mxu0 %v310
    %547 = vmatpush.bf16.msra.mxu0 %v308
    %548 = vmatpush.bf16.msra.mxu0 %v306
    %549 = vmatpush.bf16.msra.mxu0 %v304
    %550 = vmatpush.bf16.msra.mxu0 %v302
    %551 = vmatpush.bf16.msra.mxu0 %v300
    %552 = vmatpush.bf16.msra.mxu0 %v298
    %553 = vmatmul.bf16.gmra.mxu0 %v127
    %v554 = vpop.f32.mrf.mxu0
    %v555 = vadd.f32 %v521, %v554
    %v556 = vpop.f32.mrf.mxu0
    %v557 = vadd.f32 %v523, %v556
    %558 = vmatmul.bf16.gmra.mxu0 %v131
    %v559 = vpop.f32.mrf.mxu0
    %v560 = vadd.f32 %v526, %v559
    %v561 = vpop.f32.mrf.mxu0
    %v562 = vadd.f32 %v528, %v561
    %563 = vmatmul.bf16.gmra.mxu0 %v135
    %v564 = vpop.f32.mrf.mxu0
    %v565 = vadd.f32 %v531, %v564
    %v566 = vpop.f32.mrf.mxu0
    %v567 = vadd.f32 %v533, %v566
    %568 = vmatmul.bf16.gmra.mxu0 %v139
    %v569 = vpop.f32.mrf.mxu0
    %v570 = vadd.f32 %v536, %v569
    %v571 = vpop.f32.mrf.mxu0
    %v572 = vadd.f32 %v538, %v571
    %573 = vmatmul.bf16.gmra.mxu0 %v143
    %v574 = vpop.f32.mrf.mxu0
    %v575 = vadd.f32 %v541, %v574
    %v576 = vpop.f32.mrf.mxu0
    %v577 = vadd.f32 %v543, %v576
    %578 = vdwg.mxu0
    %579 = vmatpush.bf16.msra.mxu0 0
    %580 = vmatpush.bf16.msra.mxu0 0
    %581 = vmatpush.bf16.msra.mxu0 %v324
    %582 = vmatpush.bf16.msra.mxu0 %v322
    %583 = vmatpush.bf16.msra.mxu0 %v320
    %584 = vmatpush.bf16.msra.mxu0 %v318
    %585 = vmatpush.bf16.msra.mxu0 %v316
    %586 = vmatpush.bf16.msra.mxu0 %v314
    %587 = vmatmul.bf16.gmra.mxu0 %v327
    %v588 = vpop.f32.mrf.mxu0
    %v589 = vadd.f32 %v555, %v588
    %v590 = vpop.f32.mrf.mxu0
    %v591 = vadd.f32 %v557, %v590
    %592 = vmatmul.bf16.gmra.mxu0 %v330
    %v593 = vpop.f32.mrf.mxu0
    %v594 = vadd.f32 %v560, %v593
    %v595 = vpop.f32.mrf.mxu0
    %v596 = vadd.f32 %v562, %v595
    %597 = vmatmul.bf16.gmra.mxu0 %v333
    %v598 = vpop.f32.mrf.mxu0
    %v599 = vadd.f32 %v565, %v598
    %v600 = vpop.f32.mrf.mxu0
    %v601 = vadd.f32 %v567, %v600
    %602 = vmatmul.bf16.gmra.mxu0 %v336
    %v603 = vpop.f32.mrf.mxu0
    %v604 = vadd.f32 %v570, %v603
    %v605 = vpop.f32.mrf.mxu0
    %v606 = vadd.f32 %v572, %v605
    %607 = vmatmul.bf16.gmra.mxu0 %v339
    %v608 = vpop.f32.mrf.mxu0
    %v609 = vadd.f32 %v575, %v608
    %v610 = vpop.f32.mrf.mxu0
    %v611 = vadd.f32 %v577, %v610
    %612 = vdwg.mxu0
    %613 = vst [vmem:[#allocation2] sm:$0xff] %v453
    %vm614 = vcmask 556032
    %615 = vst.msk [vmem:[#allocation2 + $0x8] sm:$0xff] %vm614, %v589
    %616 = vst [vmem:[#allocation2 + $0x10] sm:$0xff] %v455
    %617 = vst.msk [vmem:[#allocation2 + $0x18] sm:$0xff] %vm614, %v591
    %618 = vst [vmem:[#allocation2 + $0x20] sm:$0xff] %v458
    %619 = vst.msk [vmem:[#allocation2 + $0x28] sm:$0xff] %vm614, %v594
    %620 = vst [vmem:[#allocation2 + $0x30] sm:$0xff] %v460
    %621 = vst.msk [vmem:[#allocation2 + $0x38] sm:$0xff] %vm614, %v596
    %622 = vst [vmem:[#allocation2 + $0x40] sm:$0xff] %v463
    %623 = vst.msk [vmem:[#allocation2 + $0x48] sm:$0xff] %vm614, %v599
    %624 = vst [vmem:[#allocation2 + $0x50] sm:$0xff] %v465
    %625 = vst.msk [vmem:[#allocation2 + $0x58] sm:$0xff] %vm614, %v601
    %626 = vst [vmem:[#allocation2 + $0x60] sm:$0xff] %v468
    %627 = vst.msk [vmem:[#allocation2 + $0x68] sm:$0xff] %vm614, %v604
    %628 = vst [vmem:[#allocation2 + $0x70] sm:$0xff] %v470
    %629 = vst.msk [vmem:[#allocation2 + $0x78] sm:$0xff] %vm614, %v606
    %630 = vst [vmem:[#allocation2 + $0x80] sm:$0xff] %v473
    %631 = vst.msk [vmem:[#allocation2 + $0x88] sm:$0xff] %vm614, %v609
    %632 = vst [vmem:[#allocation2 + $0x90] sm:$0xff] %v475
    %633 = vst.msk [vmem:[#allocation2 + $0x98] sm:$0xff] %vm614, %v611
    // Predicated region
    $region14: #{tpu_custom_call.1} parent=1 // pred_check
      _
    $region15: #{tpu_custom_call.1} parent=1 // pred_check_branch
      %635 = sbr.rel (0) target = $region17
    $region16: #{tpu_custom_call.1} parent=1 // pred_region
      %637 = vsyncadd [#allocation3], 0
      %s638 = sshll.u32 [#allocation2], 4
      %s639 = int_to_ptr.vmem [resolvable:$true] %s638
      %s640 = sshll.u32 %s3, 4
      %s641 = int_to_ptr.hbm [resolvable:$true] %s640
      %646 = dma.vmem_to_hbm [thread:$0]  %s639, 2560, %s641, [#allocation3], 256, 256, 16
    $region17: #{tpu_custom_call.1} parent=1 // pred_fallthru
      _
    // Predicated region
    $region18: #{tpu_custom_call.1} parent=1 // pred_check
      _
    $region19: #{tpu_custom_call.1} parent=1 // pred_check_branch
      %648 = sbr.rel (0) target = $region21
    $region20: #{tpu_custom_call.1} parent=1 // pred_region
      %650 = dma.done [#allocation3], 2560
    $region21: #{tpu_custom_call.1} parent=1 // pred_fallthru
      _
    %651 = vsyncpa [#allocation3], 1

</llo_original>
